<compile_context>
chip_gen: v7x
topology: tpu7x:2x2x1
jax: 0.10.0
libtpu: 0.0.40
codegen_flags: <defaults>
</compile_context>

<pallas_src>
import functools
import math

import jax
import jax.numpy as jnp
from jax import lax
from jax.experimental import pallas as pl
from jax.experimental.pallas import tpu as pltpu


def gqa_kernel(x_ref, wq_ref, bq_ref, wk_ref, bk_ref, wv_ref, bv_ref,
               wo_ref, bo_ref, o_ref,
               *, num_heads_q, num_groups, head_dim, kv_chunk):
    S = x_ref.shape[1]
    H = num_heads_q * head_dim
    num_heads_kv = num_heads_q // num_groups
    G = num_groups

    # ---- Q/K/V projections: bf16 operands on the MXU, f32 accumulate ----
    xb = x_ref[0].astype(jnp.bfloat16)                          # (S, H)
    wq = wq_ref[...].astype(jnp.bfloat16)
    wk = wk_ref[...].astype(jnp.bfloat16)
    wv = wv_ref[...].astype(jnp.bfloat16)
    wo = wo_ref[...].astype(jnp.bfloat16)

    q = jnp.dot(xb, wq, preferred_element_type=jnp.float32) + bq_ref[...]
    k = jnp.dot(xb, wk, preferred_element_type=jnp.float32) + bk_ref[...]
    v = jnp.dot(xb, wv, preferred_element_type=jnp.float32) + bv_ref[...]

    # Fold 1/sqrt(Dh) into q once (instead of scaling every score tile).
    q = q * (1.0 / math.sqrt(head_dim))

    qb = q.astype(jnp.bfloat16)
    kb = k.astype(jnp.bfloat16)
    vb = v.astype(jnp.bfloat16)

    num_kv_chunks = -(-S // kv_chunk)                           # static python int

    out_acc = jnp.zeros((S, H), jnp.float32)                    # f32 output accumulator

    # Static loop over KV heads; the G query heads sharing this KV head are
    # stacked along the row (M) axis so the MXU sees one large matmul.
    # KV head of query head h is h // num_groups  (== repeat_interleave).
    for j in range(num_heads_kv):
        kj = kb[:, j * head_dim:(j + 1) * head_dim]             # (S, Dh)
        vj = vb[:, j * head_dim:(j + 1) * head_dim]             # (S, Dh)
        q_grp = jnp.concatenate(
            [qb[:, (j * G + g) * head_dim:(j * G + g + 1) * head_dim]
             for g in range(G)], axis=0)                        # (G*S, Dh)

        # Flash-style online softmax over KV chunks (softmax math stays f32).
        m = jnp.full((G * S, 1), -jnp.inf, dtype=jnp.float32)
        l = jnp.zeros((G * S, 1), dtype=jnp.float32)
        acc = jnp.zeros((G * S, head_dim), dtype=jnp.float32)
        for c in range(num_kv_chunks):
            k_c = kj[c * kv_chunk:(c + 1) * kv_chunk, :]        # (tk, Dh)
            v_c = vj[c * kv_chunk:(c + 1) * kv_chunk, :]
            # Scores without materializing k_c.T: contract dim 1 of both.
            s = lax.dot_general(q_grp, k_c,
                                dimension_numbers=(((1,), (1,)), ((), ())),
                                preferred_element_type=jnp.float32)  # (G*S, tk)
            m_new = jnp.maximum(m, jnp.max(s, axis=-1, keepdims=True))
            alpha = jnp.exp(m - m_new)
            p = jnp.exp(s - m_new)
            l = alpha * l + jnp.sum(p, axis=-1, keepdims=True)
            acc = alpha * acc + jnp.dot(p.astype(jnp.bfloat16), v_c,
                                        preferred_element_type=jnp.float32)
            m = m_new

        o = acc * pl.reciprocal(l, approx=True)                 # (G*S, Dh) f32

        # Per-head output projection accumulated directly (no concat scratch,
        # O-proj overlaps the next group's attention in the MXU pipeline).
        for g in range(G):
            h = j * G + g
            oh = o[g * S:(g + 1) * S, :].astype(jnp.bfloat16)   # (S, Dh)
            wo_h = wo[h * head_dim:(h + 1) * head_dim, :]       # (Dh, H)
            out_acc = out_acc + jnp.dot(oh, wo_h,
                                        preferred_element_type=jnp.float32)

    o_ref[0] = (out_acc + bo_ref[...]).astype(o_ref.dtype)


def gqa_forward(x, params, num_heads, num_groups, *, kv_chunk=None):
    B, S, H = x.shape
    assert num_heads % num_groups == 0
    assert H % num_heads == 0
    head_dim = H // num_heads
    kv_dim = params["wk"].shape[1]
    assert kv_dim == head_dim * (num_heads // num_groups)
    if kv_chunk is None:
        kv_chunk = min(S, 512)

    kernel = functools.partial(
        gqa_kernel,
        num_heads_q=num_heads,
        num_groups=num_groups,
        head_dim=head_dim,
        kv_chunk=kv_chunk,
    )

    def full_spec(shape):
        return pl.BlockSpec(shape, lambda b, _n=len(shape): (0,) * _n)

    # Explicit VMEM budget: x/out blocks (double-buffered) + resident weights.
    itemsize = x.dtype.itemsize
    io_bytes = 2 * 2 * S * H * itemsize
    w_bytes = sum(int(params[n].size) * params[n].dtype.itemsize
                  for n in ("wq", "bq", "wk", "bk", "wv", "bv", "wo", "bo"))
    vmem_limit = min(int(2.0 * (io_bytes + 2 * w_bytes)) + (8 << 20), 64 << 20)

    return pl.pallas_call(
        kernel,
        out_shape=jax.ShapeDtypeStruct((B, S, H), x.dtype),
        grid=(B,),
        in_specs=[
            pl.BlockSpec((1, S, H), lambda b: (b, 0, 0)),       # x
            full_spec((H, H)), full_spec((1, H)),               # Wq, bq
            full_spec((H, kv_dim)), full_spec((1, kv_dim)),     # Wk, bk
            full_spec((H, kv_dim)), full_spec((1, kv_dim)),     # Wv, bv
            full_spec((H, H)), full_spec((1, H)),               # Wo, bo
        ],
        out_specs=pl.BlockSpec((1, S, H), lambda b: (b, 0, 0)),
        compiler_params=pltpu.CompilerParams(
            dimension_semantics=("parallel",),
            vmem_limit_bytes=vmem_limit,
        ),
    )(x, params["wq"], params["bq"], params["wk"], params["bk"],
      params["wv"], params["bv"], params["wo"], params["bo"])


def gqa_reference(x, params, num_heads, num_groups):
    """Pure-JAX (f32) mirror of the PyTorch forward (mask=None, dropout=identity)."""
    B, S, H = x.shape
    Dh = H // num_heads
    Hkv = num_heads // num_groups
    q = x @ params["wq"] + params["bq"][0]
    k = x @ params["wk"] + params["bk"][0]
    v = x @ params["wv"] + params["bv"][0]
    q = q.reshape(B, S, num_heads, Dh).transpose(0, 2, 1, 3)
    k = k.reshape(B, S, Hkv, Dh).transpose(0, 2, 1, 3)
    v = v.reshape(B, S, Hkv, Dh).transpose(0, 2, 1, 3)
    k = jnp.repeat(k, num_groups, axis=1)                       # repeat_interleave
    v = jnp.repeat(v, num_groups, axis=1)
    w = jnp.einsum("bhqd,bhkd->bhqk", q, k) / math.sqrt(Dh)
    w = jax.nn.softmax(w, axis=-1)
    o = jnp.einsum("bhqk,bhkd->bhqd", w, v)
    o = o.transpose(0, 2, 1, 3).reshape(B, S, H)
    return o @ params["wo"] + params["bo"][0]


def init_params(key, hidden_dim, num_heads, num_groups):
    head_dim = hidden_dim // num_heads
    num_heads_kv = num_heads // num_groups
    kv_dim = head_dim * num_heads_kv
    scale = 1.0 / math.sqrt(hidden_dim)
    ks = jax.random.split(key, 8)
    return {
        "wq": jax.random.uniform(ks[0], (hidden_dim, hidden_dim), jnp.float32, -scale, scale),
        "bq": jax.random.uniform(ks[1], (1, hidden_dim), jnp.float32, -scale, scale),
        "wk": jax.random.uniform(ks[2], (hidden_dim, kv_dim), jnp.float32, -scale, scale),
        "bk": jax.random.uniform(ks[3], (1, kv_dim), jnp.float32, -scale, scale),
        "wv": jax.random.uniform(ks[4], (hidden_dim, kv_dim), jnp.float32, -scale, scale),
        "bv": jax.random.uniform(ks[5], (1, kv_dim), jnp.float32, -scale, scale),
        "wo": jax.random.uniform(ks[6], (hidden_dim, hidden_dim), jnp.float32, -scale, scale),
        "bo": jax.random.uniform(ks[7], (1, hidden_dim), jnp.float32, -scale, scale),
    }


if __name__ == "__main__":
    B, S, H = 2, 8, 32
    num_heads, num_groups = 4, 2          # head_dim = 8, num_heads_kv = 2

    key = jax.random.PRNGKey(0)
    k_x, k_p = jax.random.split(key)
    x = jax.random.normal(k_x, (B, S, H), dtype=jnp.float32)
    params = init_params(k_p, H, num_heads, num_groups)

    out = gqa_forward(x, params, num_heads, num_groups)
    out = jax.block_until_ready(out)

    ref = gqa_reference(x, params, num_heads, num_groups)
    assert out.shape == (B, S, H)
    # bf16 MXU operands + approx reciprocal => loose tolerance vs f32 reference.
    assert jnp.allclose(out, ref, atol=5e-2, rtol=5e-2), "Pallas GQA mismatch vs reference"

    print("KERNEL_OK")
</pallas_src>

<mosaic_0001>
module attributes {stable_mosaic.version = 11 : i64} {
  func.func @gqa_kernel(%arg0: i32, %arg1: memref<1x8x32xf32, #tpu.memory_space<vmem>>, %arg2: memref<32x32xf32, #tpu.memory_space<vmem>>, %arg3: memref<1x32xf32, #tpu.memory_space<vmem>>, %arg4: memref<32x16xf32, #tpu.memory_space<vmem>>, %arg5: memref<1x16xf32, #tpu.memory_space<vmem>>, %arg6: memref<32x16xf32, #tpu.memory_space<vmem>>, %arg7: memref<1x16xf32, #tpu.memory_space<vmem>>, %arg8: memref<32x32xf32, #tpu.memory_space<vmem>>, %arg9: memref<1x32xf32, #tpu.memory_space<vmem>>, %arg10: memref<1x8x32xf32, #tpu.memory_space<vmem>>) attributes {dimension_semantics = [#tpu.dimension_semantics<parallel>], iteration_bounds = array<i64: 2>, scalar_prefetch = 0 : i64, scratch_operands = 0 : i64, tpu.core_type = #tpu.core_type<tc>, window_params = [{transform_indices = @transform_0, window_bounds = array<i64: 1, 8, 32>}, {pipeline_mode = #tpu.pipeline_mode<synchronous>, transform_indices = @transform_1, window_bounds = array<i64: 32, 32>}, {pipeline_mode = #tpu.pipeline_mode<synchronous>, transform_indices = @transform_2, window_bounds = array<i64: 1, 32>}, {pipeline_mode = #tpu.pipeline_mode<synchronous>, transform_indices = @transform_3, window_bounds = array<i64: 32, 16>}, {pipeline_mode = #tpu.pipeline_mode<synchronous>, transform_indices = @transform_4, window_bounds = array<i64: 1, 16>}, {pipeline_mode = #tpu.pipeline_mode<synchronous>, transform_indices = @transform_5, window_bounds = array<i64: 32, 16>}, {pipeline_mode = #tpu.pipeline_mode<synchronous>, transform_indices = @transform_6, window_bounds = array<i64: 1, 16>}, {pipeline_mode = #tpu.pipeline_mode<synchronous>, transform_indices = @transform_7, window_bounds = array<i64: 32, 32>}, {pipeline_mode = #tpu.pipeline_mode<synchronous>, transform_indices = @transform_8, window_bounds = array<i64: 1, 32>}, {transform_indices = @transform_9, window_bounds = array<i64: 1, 8, 32>}]} {
    %c0 = arith.constant 0 : index
    %c0_0 = arith.constant 0 : index
    %c0_1 = arith.constant 0 : index
    %0 = vector.load %arg1[%c0, %c0_0, %c0_1] : memref<1x8x32xf32, #tpu.memory_space<vmem>>, vector<1x8x32xf32>
    %1 = vector.shape_cast %0 : vector<1x8x32xf32> to vector<8x32xf32>
    %2 = arith.truncf %1 : vector<8x32xf32> to vector<8x32xbf16>
    %c0_2 = arith.constant 0 : index
    %c0_3 = arith.constant 0 : index
    %3 = vector.load %arg2[%c0_2, %c0_3] : memref<32x32xf32, #tpu.memory_space<vmem>>, vector<32x32xf32>
    %4 = arith.truncf %3 : vector<32x32xf32> to vector<32x32xbf16>
    %c0_4 = arith.constant 0 : index
    %c0_5 = arith.constant 0 : index
    %5 = vector.load %arg4[%c0_4, %c0_5] : memref<32x16xf32, #tpu.memory_space<vmem>>, vector<32x16xf32>
    %6 = arith.truncf %5 : vector<32x16xf32> to vector<32x16xbf16>
    %c0_6 = arith.constant 0 : index
    %c0_7 = arith.constant 0 : index
    %7 = vector.load %arg6[%c0_6, %c0_7] : memref<32x16xf32, #tpu.memory_space<vmem>>, vector<32x16xf32>
    %8 = arith.truncf %7 : vector<32x16xf32> to vector<32x16xbf16>
    %c0_8 = arith.constant 0 : index
    %c0_9 = arith.constant 0 : index
    %9 = vector.load %arg8[%c0_8, %c0_9] : memref<32x32xf32, #tpu.memory_space<vmem>>, vector<32x32xf32>
    %10 = arith.truncf %9 : vector<32x32xf32> to vector<32x32xbf16>
    %cst = arith.constant dense<0.000000e+00> : vector<8x32xf32>
    %11 = tpu.matmul %2, %4, %cst {dimension_numbers = #tpu.dot_dimension_numbers<[1], [0], [0], [1], [0, 0, 1, 1], [], []>} : vector<8x32xbf16>, vector<32x32xbf16>, vector<8x32xf32> -> vector<8x32xf32>
    %c0_10 = arith.constant 0 : index
    %c0_11 = arith.constant 0 : index
    %12 = vector.load %arg3[%c0_10, %c0_11] : memref<1x32xf32, #tpu.memory_space<vmem>>, vector<1x32xf32>
    %13 = vector.broadcast %12 : vector<1x32xf32> to vector<8x32xf32>
    %14 = arith.addf %11, %13 : vector<8x32xf32>
    %cst_12 = arith.constant dense<0.000000e+00> : vector<8x16xf32>
    %15 = tpu.matmul %2, %6, %cst_12 {dimension_numbers = #tpu.dot_dimension_numbers<[1], [0], [0], [1], [0, 0, 1, 1], [], []>} : vector<8x32xbf16>, vector<32x16xbf16>, vector<8x16xf32> -> vector<8x16xf32>
    %c0_13 = arith.constant 0 : index
    %c0_14 = arith.constant 0 : index
    %16 = vector.load %arg5[%c0_13, %c0_14] : memref<1x16xf32, #tpu.memory_space<vmem>>, vector<1x16xf32>
    %17 = vector.broadcast %16 : vector<1x16xf32> to vector<8x16xf32>
    %18 = arith.addf %15, %17 : vector<8x16xf32>
    %cst_15 = arith.constant dense<0.000000e+00> : vector<8x16xf32>
    %19 = tpu.matmul %2, %8, %cst_15 {dimension_numbers = #tpu.dot_dimension_numbers<[1], [0], [0], [1], [0, 0, 1, 1], [], []>} : vector<8x32xbf16>, vector<32x16xbf16>, vector<8x16xf32> -> vector<8x16xf32>
    %c0_16 = arith.constant 0 : index
    %c0_17 = arith.constant 0 : index
    %20 = vector.load %arg7[%c0_16, %c0_17] : memref<1x16xf32, #tpu.memory_space<vmem>>, vector<1x16xf32>
    %21 = vector.broadcast %20 : vector<1x16xf32> to vector<8x16xf32>
    %22 = arith.addf %19, %21 : vector<8x16xf32>
    %cst_18 = arith.constant 0.353553385 : f32
    %23 = vector.broadcast %cst_18 : f32 to vector<8x32xf32>
    %24 = arith.mulf %14, %23 : vector<8x32xf32>
    %25 = arith.truncf %24 : vector<8x32xf32> to vector<8x32xbf16>
    %26 = arith.truncf %18 : vector<8x16xf32> to vector<8x16xbf16>
    %27 = arith.truncf %22 : vector<8x16xf32> to vector<8x16xbf16>
    %cst_19 = arith.constant 0.000000e+00 : f32
    %28 = vector.broadcast %cst_19 : f32 to vector<8x32xf32>
    %29 = vector.extract_strided_slice %26 {offsets = [0, 0], sizes = [8, 8], strides = [1, 1]} : vector<8x16xbf16> to vector<8x8xbf16>
    %30 = vector.extract_strided_slice %27 {offsets = [0, 0], sizes = [8, 8], strides = [1, 1]} : vector<8x16xbf16> to vector<8x8xbf16>
    %31 = vector.extract_strided_slice %25 {offsets = [0, 0], sizes = [8, 8], strides = [1, 1]} : vector<8x32xbf16> to vector<8x8xbf16>
    %32 = vector.extract_strided_slice %25 {offsets = [0, 8], sizes = [8, 8], strides = [1, 1]} : vector<8x32xbf16> to vector<8x8xbf16>
    %33 = tpu.concatenate %31, %32 in 0 : vector<8x8xbf16>, vector<8x8xbf16> -> vector<16x8xbf16>
    %cst_20 = arith.constant 0xFF800000 : f32
    %34 = vector.broadcast %cst_20 : f32 to vector<16x1xf32>
    %cst_21 = arith.constant 0.000000e+00 : f32
    %35 = vector.broadcast %cst_21 : f32 to vector<16x1xf32>
    %cst_22 = arith.constant 0.000000e+00 : f32
    %36 = vector.broadcast %cst_22 : f32 to vector<16x8xf32>
    %cst_23 = arith.constant dense<0.000000e+00> : vector<16x8xf32>
    %37 = tpu.matmul %33, %29, %cst_23 {dimension_numbers = #tpu.dot_dimension_numbers<[1], [1], [0], [0], [0, 0, 1, 0], [], []>} : vector<16x8xbf16>, vector<8x8xbf16>, vector<16x8xf32> -> vector<16x8xf32>
    %cst_24 = arith.constant dense<0xFF800000> : vector<16xf32>
    %38 = vector.multi_reduction <maximumf>, %37, %cst_24 [1] : vector<16x8xf32> to vector<16xf32>
    %39 = vector.shape_cast %38 : vector<16xf32> to vector<16x1xf32>
    %40 = arith.maximumf %34, %39 : vector<16x1xf32>
    %41 = arith.subf %34, %40 : vector<16x1xf32>
    %42 = math.exp %41 : vector<16x1xf32>
    %43 = vector.broadcast %40 : vector<16x1xf32> to vector<16x8xf32>
    %44 = arith.subf %37, %43 : vector<16x8xf32>
    %45 = math.exp %44 : vector<16x8xf32>
    %46 = arith.mulf %42, %35 : vector<16x1xf32>
    %cst_25 = arith.constant dense<0.000000e+00> : vector<16xf32>
    %47 = vector.multi_reduction <add>, %45, %cst_25 [1] : vector<16x8xf32> to vector<16xf32>
    %48 = vector.shape_cast %47 : vector<16xf32> to vector<16x1xf32>
    %49 = arith.addf %46, %48 : vector<16x1xf32>
    %50 = vector.broadcast %42 : vector<16x1xf32> to vector<16x8xf32>
    %51 = arith.mulf %50, %36 : vector<16x8xf32>
    %52 = arith.truncf %45 : vector<16x8xf32> to vector<16x8xbf16>
    %cst_26 = arith.constant dense<0.000000e+00> : vector<16x8xf32>
    %53 = tpu.matmul %52, %30, %cst_26 {dimension_numbers = #tpu.dot_dimension_numbers<[1], [0], [0], [1], [0, 0, 1, 1], [], []>} : vector<16x8xbf16>, vector<8x8xbf16>, vector<16x8xf32> -> vector<16x8xf32>
    %54 = arith.addf %51, %53 : vector<16x8xf32>
    %55 = tpu.reciprocal %49 {approx = true} : vector<16x1xf32> -> vector<16x1xf32>
    %56 = vector.broadcast %55 : vector<16x1xf32> to vector<16x8xf32>
    %57 = arith.mulf %54, %56 : vector<16x8xf32>
    %58 = vector.extract_strided_slice %57 {offsets = [0, 0], sizes = [8, 8], strides = [1, 1]} : vector<16x8xf32> to vector<8x8xf32>
    %59 = arith.truncf %58 : vector<8x8xf32> to vector<8x8xbf16>
    %60 = vector.extract_strided_slice %10 {offsets = [0, 0], sizes = [8, 32], strides = [1, 1]} : vector<32x32xbf16> to vector<8x32xbf16>
    %cst_27 = arith.constant dense<0.000000e+00> : vector<8x32xf32>
    %61 = tpu.matmul %59, %60, %cst_27 {dimension_numbers = #tpu.dot_dimension_numbers<[1], [0], [0], [1], [0, 0, 1, 1], [], []>} : vector<8x8xbf16>, vector<8x32xbf16>, vector<8x32xf32> -> vector<8x32xf32>
    %62 = arith.addf %28, %61 : vector<8x32xf32>
    %63 = vector.extract_strided_slice %57 {offsets = [8, 0], sizes = [8, 8], strides = [1, 1]} : vector<16x8xf32> to vector<8x8xf32>
    %64 = arith.truncf %63 : vector<8x8xf32> to vector<8x8xbf16>
    %65 = vector.extract_strided_slice %10 {offsets = [8, 0], sizes = [8, 32], strides = [1, 1]} : vector<32x32xbf16> to vector<8x32xbf16>
    %cst_28 = arith.constant dense<0.000000e+00> : vector<8x32xf32>
    %66 = tpu.matmul %64, %65, %cst_28 {dimension_numbers = #tpu.dot_dimension_numbers<[1], [0], [0], [1], [0, 0, 1, 1], [], []>} : vector<8x8xbf16>, vector<8x32xbf16>, vector<8x32xf32> -> vector<8x32xf32>
    %67 = arith.addf %62, %66 : vector<8x32xf32>
    %68 = vector.extract_strided_slice %26 {offsets = [0, 8], sizes = [8, 8], strides = [1, 1]} : vector<8x16xbf16> to vector<8x8xbf16>
    %69 = vector.extract_strided_slice %27 {offsets = [0, 8], sizes = [8, 8], strides = [1, 1]} : vector<8x16xbf16> to vector<8x8xbf16>
    %70 = vector.extract_strided_slice %25 {offsets = [0, 16], sizes = [8, 8], strides = [1, 1]} : vector<8x32xbf16> to vector<8x8xbf16>
    %71 = vector.extract_strided_slice %25 {offsets = [0, 24], sizes = [8, 8], strides = [1, 1]} : vector<8x32xbf16> to vector<8x8xbf16>
    %72 = tpu.concatenate %70, %71 in 0 : vector<8x8xbf16>, vector<8x8xbf16> -> vector<16x8xbf16>
    %cst_29 = arith.constant 0xFF800000 : f32
    %73 = vector.broadcast %cst_29 : f32 to vector<16x1xf32>
    %cst_30 = arith.constant 0.000000e+00 : f32
    %74 = vector.broadcast %cst_30 : f32 to vector<16x1xf32>
    %cst_31 = arith.constant 0.000000e+00 : f32
    %75 = vector.broadcast %cst_31 : f32 to vector<16x8xf32>
    %cst_32 = arith.constant dense<0.000000e+00> : vector<16x8xf32>
    %76 = tpu.matmul %72, %68, %cst_32 {dimension_numbers = #tpu.dot_dimension_numbers<[1], [1], [0], [0], [0, 0, 1, 0], [], []>} : vector<16x8xbf16>, vector<8x8xbf16>, vector<16x8xf32> -> vector<16x8xf32>
    %cst_33 = arith.constant dense<0xFF800000> : vector<16xf32>
    %77 = vector.multi_reduction <maximumf>, %76, %cst_33 [1] : vector<16x8xf32> to vector<16xf32>
    %78 = vector.shape_cast %77 : vector<16xf32> to vector<16x1xf32>
    %79 = arith.maximumf %73, %78 : vector<16x1xf32>
    %80 = arith.subf %73, %79 : vector<16x1xf32>
    %81 = math.exp %80 : vector<16x1xf32>
    %82 = vector.broadcast %79 : vector<16x1xf32> to vector<16x8xf32>
    %83 = arith.subf %76, %82 : vector<16x8xf32>
    %84 = math.exp %83 : vector<16x8xf32>
    %85 = arith.mulf %81, %74 : vector<16x1xf32>
    %cst_34 = arith.constant dense<0.000000e+00> : vector<16xf32>
    %86 = vector.multi_reduction <add>, %84, %cst_34 [1] : vector<16x8xf32> to vector<16xf32>
    %87 = vector.shape_cast %86 : vector<16xf32> to vector<16x1xf32>
    %88 = arith.addf %85, %87 : vector<16x1xf32>
    %89 = vector.broadcast %81 : vector<16x1xf32> to vector<16x8xf32>
    %90 = arith.mulf %89, %75 : vector<16x8xf32>
    %91 = arith.truncf %84 : vector<16x8xf32> to vector<16x8xbf16>
    %cst_35 = arith.constant dense<0.000000e+00> : vector<16x8xf32>
    %92 = tpu.matmul %91, %69, %cst_35 {dimension_numbers = #tpu.dot_dimension_numbers<[1], [0], [0], [1], [0, 0, 1, 1], [], []>} : vector<16x8xbf16>, vector<8x8xbf16>, vector<16x8xf32> -> vector<16x8xf32>
    %93 = arith.addf %90, %92 : vector<16x8xf32>
    %94 = tpu.reciprocal %88 {approx = true} : vector<16x1xf32> -> vector<16x1xf32>
    %95 = vector.broadcast %94 : vector<16x1xf32> to vector<16x8xf32>
    %96 = arith.mulf %93, %95 : vector<16x8xf32>
    %97 = vector.extract_strided_slice %96 {offsets = [0, 0], sizes = [8, 8], strides = [1, 1]} : vector<16x8xf32> to vector<8x8xf32>
    %98 = arith.truncf %97 : vector<8x8xf32> to vector<8x8xbf16>
    %99 = vector.extract_strided_slice %10 {offsets = [16, 0], sizes = [8, 32], strides = [1, 1]} : vector<32x32xbf16> to vector<8x32xbf16>
    %cst_36 = arith.constant dense<0.000000e+00> : vector<8x32xf32>
    %100 = tpu.matmul %98, %99, %cst_36 {dimension_numbers = #tpu.dot_dimension_numbers<[1], [0], [0], [1], [0, 0, 1, 1], [], []>} : vector<8x8xbf16>, vector<8x32xbf16>, vector<8x32xf32> -> vector<8x32xf32>
    %101 = arith.addf %67, %100 : vector<8x32xf32>
    %102 = vector.extract_strided_slice %96 {offsets = [8, 0], sizes = [8, 8], strides = [1, 1]} : vector<16x8xf32> to vector<8x8xf32>
    %103 = arith.truncf %102 : vector<8x8xf32> to vector<8x8xbf16>
    %104 = vector.extract_strided_slice %10 {offsets = [24, 0], sizes = [8, 32], strides = [1, 1]} : vector<32x32xbf16> to vector<8x32xbf16>
    %cst_37 = arith.constant dense<0.000000e+00> : vector<8x32xf32>
    %105 = tpu.matmul %103, %104, %cst_37 {dimension_numbers = #tpu.dot_dimension_numbers<[1], [0], [0], [1], [0, 0, 1, 1], [], []>} : vector<8x8xbf16>, vector<8x32xbf16>, vector<8x32xf32> -> vector<8x32xf32>
    %106 = arith.addf %101, %105 : vector<8x32xf32>
    %c0_38 = arith.constant 0 : index
    %c0_39 = arith.constant 0 : index
    %107 = vector.load %arg9[%c0_38, %c0_39] : memref<1x32xf32, #tpu.memory_space<vmem>>, vector<1x32xf32>
    %108 = vector.broadcast %107 : vector<1x32xf32> to vector<8x32xf32>
    %109 = arith.addf %106, %108 : vector<8x32xf32>
    %c0_40 = arith.constant 0 : index
    %c0_41 = arith.constant 0 : index
    %c0_42 = arith.constant 0 : index
    %110 = vector.load %arg10[%c0_40, %c0_41, %c0_42] : memref<1x8x32xf32, #tpu.memory_space<vmem>>, vector<1x8x32xf32>
    %111 = vector.shape_cast %110 : vector<1x8x32xf32> to vector<8x32xf32>
    %112 = vector.shape_cast %109 : vector<8x32xf32> to vector<1x8x32xf32>
    tpu.vector_store %arg10[%c0_40, %c0_41, %c0_42], %112 {strides = array<i32>} : memref<1x8x32xf32, #tpu.memory_space<vmem>>, vector<1x8x32xf32>,
    return
  }
  func.func @transform_0(%arg0: i32) -> (i32, i32, i32) {
    %c0_i32 = arith.constant 0 : i32
    %c0_i32_0 = arith.constant 0 : i32
    %c0_i32_1 = arith.constant 0 : i32
    return %arg0, %c0_i32, %c0_i32_0 : i32, i32, i32
  }
  func.func @transform_1(%arg0: i32) -> (i32, i32) {
    %c0_i32 = arith.constant 0 : i32
    %c0_i32_0 = arith.constant 0 : i32
    %c0_i32_1 = arith.constant 0 : i32
    return %c0_i32, %c0_i32_0 : i32, i32
  }
  func.func @transform_2(%arg0: i32) -> (i32, i32) {
    %c0_i32 = arith.constant 0 : i32
    %c0_i32_0 = arith.constant 0 : i32
    %c0_i32_1 = arith.constant 0 : i32
    return %c0_i32, %c0_i32_0 : i32, i32
  }
  func.func @transform_3(%arg0: i32) -> (i32, i32) {
    %c0_i32 = arith.constant 0 : i32
    %c0_i32_0 = arith.constant 0 : i32
    %c0_i32_1 = arith.constant 0 : i32
    return %c0_i32, %c0_i32_0 : i32, i32
  }
  func.func @transform_4(%arg0: i32) -> (i32, i32) {
    %c0_i32 = arith.constant 0 : i32
    %c0_i32_0 = arith.constant 0 : i32
    %c0_i32_1 = arith.constant 0 : i32
    return %c0_i32, %c0_i32_0 : i32, i32
  }
  func.func @transform_5(%arg0: i32) -> (i32, i32) {
    %c0_i32 = arith.constant 0 : i32
    %c0_i32_0 = arith.constant 0 : i32
    %c0_i32_1 = arith.constant 0 : i32
    return %c0_i32, %c0_i32_0 : i32, i32
  }
  func.func @transform_6(%arg0: i32) -> (i32, i32) {
    %c0_i32 = arith.constant 0 : i32
    %c0_i32_0 = arith.constant 0 : i32
    %c0_i32_1 = arith.constant 0 : i32
    return %c0_i32, %c0_i32_0 : i32, i32
  }
  func.func @transform_7(%arg0: i32) -> (i32, i32) {
    %c0_i32 = arith.constant 0 : i32
    %c0_i32_0 = arith.constant 0 : i32
    %c0_i32_1 = arith.constant 0 : i32
    return %c0_i32, %c0_i32_0 : i32, i32
  }
  func.func @transform_8(%arg0: i32) -> (i32, i32) {
    %c0_i32 = arith.constant 0 : i32
    %c0_i32_0 = arith.constant 0 : i32
    %c0_i32_1 = arith.constant 0 : i32
    return %c0_i32, %c0_i32_0 : i32, i32
  }
  func.func @transform_9(%arg0: i32) -> (i32, i32, i32) {
    %c0_i32 = arith.constant 0 : i32
    %c0_i32_0 = arith.constant 0 : i32
    %c0_i32_1 = arith.constant 0 : i32
    return %arg0, %c0_i32, %c0_i32_0 : i32, i32, i32
  }
}

</mosaic_0001>

<llo_original>
// kernel: tpu_custom_call.1
$region0: #{tpu_custom_call.1}
  #allocation0 [shape = 'u32[]', space=smem, size = 0x4, offset = 0x4, fixed_abs, tag = 'smem constant byte address 0x4 - core index']
  #allocation1 [shape = 'u32[144,128]{1,0:T(1,128)}', space=vmem, size = 0x12000, scoped, tag = 'internal scratch']
  %s0 = inlined_call_operand.vmem [shape: f32[2,8,32], index: 0, kind: input, shape index: {}]
  %s1 = inlined_call_operand.vmem [shape: f32[32,32], index: 1, kind: input, shape index: {}]
  %s2 = inlined_call_operand.vmem [shape: f32[1,32], index: 2, kind: input, shape index: {}]
  %s3 = inlined_call_operand.vmem [shape: f32[32,16], index: 3, kind: input, shape index: {}]
  %s4 = inlined_call_operand.vmem [shape: f32[1,16], index: 4, kind: input, shape index: {}]
  %s5 = inlined_call_operand.vmem [shape: f32[32,16], index: 5, kind: input, shape index: {}]
  %s6 = inlined_call_operand.vmem [shape: f32[1,16], index: 6, kind: input, shape index: {}]
  %s7 = inlined_call_operand.vmem [shape: f32[32,32], index: 7, kind: input, shape index: {}]
  %s8 = inlined_call_operand.vmem [shape: f32[1,32], index: 8, kind: input, shape index: {}]
  %s9 = inlined_call_operand.hbm [shape: f32[2,8,32], index: 9, kind: output, shape index: {}]
  %s10 = sld [smem:[#allocation0]]
  $region69: #{tpu_custom_call.1} parent=0
    _
  %s12 = ssub.s32 1, %s10
  %s13 = scalar_select 0, %s12, %s10
  $region1: #{tpu_custom_call.1} parent=0
    #allocation2 [shape = 'u8[8192]{0}', space=vmem, size = 0x2000, scoped, tag = 'output window, operand 0']
    #allocation3 [shape = 's32[2]{0}', space=sflag, size = 0x8, scoped, tag = 'scoped memory for tpu_custom_call.1']
    %14 = vsyncpa [#allocation3], 0
    %s15 = scalar_lea.sflag [#allocation3], 1
    %16 = vsyncpa %s15, 0
    loop: start=0, step=1, limit=4
    $region2: #{tpu_custom_call.1} parent=1 // loop_pre_header
      _
    $region3: #{tpu_custom_call.1} parent=1 // loop_header
      %s18 = sphi 0, %s22
      %p19 = scmp.ge.s32.totalorder %s18, 4
      %s28 = sphi 0, %s30
      %s31 = sphi 0, %s28
      %s32 = sphi 0, %s31
      %s48 = sphi 0, %s32
      %s52 = sphi 0, %s52
      %s54 = sphi 0, %s52
      %s55 = sphi 0, %s54
      %s69 = sphi 0, %s55
      %s73 = sphi 0, %s73
      %s75 = sphi 0, %s73
      %s76 = sphi 0, %s75
      %s90 = sphi 0, %s76
      %s94 = sphi 0, %s94
      %s96 = sphi 0, %s94
      %s97 = sphi 0, %s96
      %s111 = sphi 0, %s97
      %s115 = sphi 0, %s115
      %s117 = sphi 0, %s115
      %s118 = sphi 0, %s117
      %s132 = sphi 0, %s118
      %s136 = sphi 0, %s136
      %s138 = sphi 0, %s136
      %s139 = sphi 0, %s138
      %s153 = sphi 0, %s139
      %s157 = sphi 0, %s157
      %s159 = sphi 0, %s157
      %s160 = sphi 0, %s159
      %s174 = sphi 0, %s160
      %s178 = sphi 0, %s178
      %s180 = sphi 0, %s178
      %s181 = sphi 0, %s180
      %s195 = sphi 0, %s181
      %s199 = sphi 0, %s199
      %s201 = sphi 0, %s199
      %s202 = sphi 0, %s201
      %s216 = sphi 0, %s202
      %s222 = sphi 0, %s224
      %s225 = sphi 0, %s222
      %s226 = sphi 0, %s225
      %s242 = sphi 0, %s226
    $region4: #{tpu_custom_call.1} parent=1 // loop_header_branch
      %21 = sbr.rel (%p19) target = $region8
    $region5: #{tpu_custom_call.1} parent=1 // loop_body
      %s23 = ssub.s32 %s18, 1
      %s24 = ssub.s32 %s18, 2
      %s25 = sadd.s32 %s18, 1
      %s26 = ssub.s32 %s18, %s25
      %p27 = scmp.eq.s32.totalorder %s26, 0
      %s29 = sadd.s32 %s28, 1
      %s30 = scalar_select %p27, %s28, %s29
      %p33 = pneg %p27
      %p34 = scmp.eq.s32.totalorder %s18, 1
      %p35 = por %p33, %p34
      %p36 = scmp.ne.s32.totalorder %s28, %s31
      %p37 = scmp.eq.s32.totalorder %s18, 0
      %p38 = por %p36, %p37
      %p39 = scmp.ne.s32.totalorder %s28, %s31
      %p40 = scmp.eq.s32.totalorder %s23, 1
      %p41 = por %p39, %p40
      %p42 = scmp.ne.s32.totalorder %s31, %s32
      %p43 = scmp.eq.s32.totalorder %s23, 0
      %p44 = por %p42, %p43
      %p45 = scmp.ne.s32.totalorder %s31, %s32
      %p46 = scmp.eq.s32.totalorder %s24, 1
      %p47 = por %p45, %p46
      %p49 = scmp.ne.s32.totalorder %s32, %s48
      %p50 = scmp.eq.s32.totalorder %s24, 0
      %p51 = por %p49, %p50
      %s53 = sadd.s32 %s52, 1
      %p56 = scmp.eq.s32.totalorder %s18, 1
      %p57 = scmp.ne.s32.totalorder %s52, %s54
      %p58 = scmp.eq.s32.totalorder %s18, 0
      %p59 = por %p57, %p58
      %p60 = scmp.ne.s32.totalorder %s52, %s54
      %p61 = scmp.eq.s32.totalorder %s23, 1
      %p62 = por %p60, %p61
      %p63 = scmp.ne.s32.totalorder %s54, %s55
      %p64 = scmp.eq.s32.totalorder %s23, 0
      %p65 = por %p63, %p64
      %p66 = scmp.ne.s32.totalorder %s54, %s55
      %p67 = scmp.eq.s32.totalorder %s24, 1
      %p68 = por %p66, %p67
      %p70 = scmp.ne.s32.totalorder %s55, %s69
      %p71 = scmp.eq.s32.totalorder %s24, 0
      %p72 = por %p70, %p71
      %s74 = sadd.s32 %s73, 1
      %p77 = scmp.eq.s32.totalorder %s18, 1
      %p78 = scmp.ne.s32.totalorder %s73, %s75
      %p79 = scmp.eq.s32.totalorder %s18, 0
      %p80 = por %p78, %p79
      %p81 = scmp.ne.s32.totalorder %s73, %s75
      %p82 = scmp.eq.s32.totalorder %s23, 1
      %p83 = por %p81, %p82
      %p84 = scmp.ne.s32.totalorder %s75, %s76
      %p85 = scmp.eq.s32.totalorder %s23, 0
      %p86 = por %p84, %p85
      %p87 = scmp.ne.s32.totalorder %s75, %s76
      %p88 = scmp.eq.s32.totalorder %s24, 1
      %p89 = por %p87, %p88
      %p91 = scmp.ne.s32.totalorder %s76, %s90
      %p92 = scmp.eq.s32.totalorder %s24, 0
      %p93 = por %p91, %p92
      %s95 = sadd.s32 %s94, 1
      %p98 = scmp.eq.s32.totalorder %s18, 1
      %p99 = scmp.ne.s32.totalorder %s94, %s96
      %p100 = scmp.eq.s32.totalorder %s18, 0
      %p101 = por %p99, %p100
      %p102 = scmp.ne.s32.totalorder %s94, %s96
      %p103 = scmp.eq.s32.totalorder %s23, 1
      %p104 = por %p102, %p103
      %p105 = scmp.ne.s32.totalorder %s96, %s97
      %p106 = scmp.eq.s32.totalorder %s23, 0
      %p107 = por %p105, %p106
      %p108 = scmp.ne.s32.totalorder %s96, %s97
      %p109 = scmp.eq.s32.totalorder %s24, 1
      %p110 = por %p108, %p109
      %p112 = scmp.ne.s32.totalorder %s97, %s111
      %p113 = scmp.eq.s32.totalorder %s24, 0
      %p114 = por %p112, %p113
      %s116 = sadd.s32 %s115, 1
      %p119 = scmp.eq.s32.totalorder %s18, 1
      %p120 = scmp.ne.s32.totalorder %s115, %s117
      %p121 = scmp.eq.s32.totalorder %s18, 0
      %p122 = por %p120, %p121
      %p123 = scmp.ne.s32.totalorder %s115, %s117
      %p124 = scmp.eq.s32.totalorder %s23, 1
      %p125 = por %p123, %p124
      %p126 = scmp.ne.s32.totalorder %s117, %s118
      %p127 = scmp.eq.s32.totalorder %s23, 0
      %p128 = por %p126, %p127
      %p129 = scmp.ne.s32.totalorder %s117, %s118
      %p130 = scmp.eq.s32.totalorder %s24, 1
      %p131 = por %p129, %p130
      %p133 = scmp.ne.s32.totalorder %s118, %s132
      %p134 = scmp.eq.s32.totalorder %s24, 0
      %p135 = por %p133, %p134
      %s137 = sadd.s32 %s136, 1
      %p140 = scmp.eq.s32.totalorder %s18, 1
      %p141 = scmp.ne.s32.totalorder %s136, %s138
      %p142 = scmp.eq.s32.totalorder %s18, 0
      %p143 = por %p141, %p142
      %p144 = scmp.ne.s32.totalorder %s136, %s138
      %p145 = scmp.eq.s32.totalorder %s23, 1
      %p146 = por %p144, %p145
      %p147 = scmp.ne.s32.totalorder %s138, %s139
      %p148 = scmp.eq.s32.totalorder %s23, 0
      %p149 = por %p147, %p148
      %p150 = scmp.ne.s32.totalorder %s138, %s139
      %p151 = scmp.eq.s32.totalorder %s24, 1
      %p152 = por %p150, %p151
      %p154 = scmp.ne.s32.totalorder %s139, %s153
      %p155 = scmp.eq.s32.totalorder %s24, 0
      %p156 = por %p154, %p155
      %s158 = sadd.s32 %s157, 1
      %p161 = scmp.eq.s32.totalorder %s18, 1
      %p162 = scmp.ne.s32.totalorder %s157, %s159
      %p163 = scmp.eq.s32.totalorder %s18, 0
      %p164 = por %p162, %p163
      %p165 = scmp.ne.s32.totalorder %s157, %s159
      %p166 = scmp.eq.s32.totalorder %s23, 1
      %p167 = por %p165, %p166
      %p168 = scmp.ne.s32.totalorder %s159, %s160
      %p169 = scmp.eq.s32.totalorder %s23, 0
      %p170 = por %p168, %p169
      %p171 = scmp.ne.s32.totalorder %s159, %s160
      %p172 = scmp.eq.s32.totalorder %s24, 1
      %p173 = por %p171, %p172
      %p175 = scmp.ne.s32.totalorder %s160, %s174
      %p176 = scmp.eq.s32.totalorder %s24, 0
      %p177 = por %p175, %p176
      %s179 = sadd.s32 %s178, 1
      %p182 = scmp.eq.s32.totalorder %s18, 1
      %p183 = scmp.ne.s32.totalorder %s178, %s180
      %p184 = scmp.eq.s32.totalorder %s18, 0
      %p185 = por %p183, %p184
      %p186 = scmp.ne.s32.totalorder %s178, %s180
      %p187 = scmp.eq.s32.totalorder %s23, 1
      %p188 = por %p186, %p187
      %p189 = scmp.ne.s32.totalorder %s180, %s181
      %p190 = scmp.eq.s32.totalorder %s23, 0
      %p191 = por %p189, %p190
      %p192 = scmp.ne.s32.totalorder %s180, %s181
      %p193 = scmp.eq.s32.totalorder %s24, 1
      %p194 = por %p192, %p193
      %p196 = scmp.ne.s32.totalorder %s181, %s195
      %p197 = scmp.eq.s32.totalorder %s24, 0
      %p198 = por %p196, %p197
      %s200 = sadd.s32 %s199, 1
      %p203 = scmp.eq.s32.totalorder %s18, 1
      %p204 = scmp.ne.s32.totalorder %s199, %s201
      %p205 = scmp.eq.s32.totalorder %s18, 0
      %p206 = por %p204, %p205
      %p207 = scmp.ne.s32.totalorder %s199, %s201
      %p208 = scmp.eq.s32.totalorder %s23, 1
      %p209 = por %p207, %p208
      %p210 = scmp.ne.s32.totalorder %s201, %s202
      %p211 = scmp.eq.s32.totalorder %s23, 0
      %p212 = por %p210, %p211
      %p213 = scmp.ne.s32.totalorder %s201, %s202
      %p214 = scmp.eq.s32.totalorder %s24, 1
      %p215 = por %p213, %p214
      %p217 = scmp.ne.s32.totalorder %s202, %s216
      %p218 = scmp.eq.s32.totalorder %s24, 0
      %p219 = por %p217, %p218
      %s220 = ssub.s32 %s18, %s25
      %p221 = scmp.eq.s32.totalorder %s220, 0
      %s223 = sadd.s32 %s222, 1
      %s224 = scalar_select %p221, %s222, %s223
      %p227 = pneg %p221
      %p228 = scmp.eq.s32.totalorder %s18, 1
      %p229 = por %p227, %p228
      %p230 = scmp.ne.s32.totalorder %s222, %s225
      %p231 = scmp.eq.s32.totalorder %s18, 0
      %p232 = por %p230, %p231
      %p233 = scmp.ne.s32.totalorder %s222, %s225
      %p234 = scmp.eq.s32.totalorder %s23, 1
      %p235 = por %p233, %p234
      %p236 = scmp.ne.s32.totalorder %s225, %s226
      %p237 = scmp.eq.s32.totalorder %s23, 0
      %p238 = por %p236, %p237
      %p239 = scmp.ne.s32.totalorder %s225, %s226
      %p240 = scmp.eq.s32.totalorder %s24, 1
      %p241 = por %p239, %p240
      %p243 = scmp.ne.s32.totalorder %s226, %s242
      %p244 = scmp.eq.s32.totalorder %s24, 0
      %p245 = por %p243, %p244
      %p246 = scmp.le.s32.totalorder 1, %s18
      %p247 = scmp.lt.s32.totalorder %s18, 3
      %p248 = pnand %p246, %p247
      %p249 = pneg %p248
      // Predicated region
      $region9: #{tpu_custom_call.1} parent=5 // pred_check
        _
      $region10: #{tpu_custom_call.1} parent=5 // pred_check_branch
        %251 = sbr.rel (%p248) target = $region12
      $region11: #{tpu_custom_call.1} parent=5 // pred_region
        %s252 = ssub.s32 %s18, 1
        // Predicated region
        $region13: #{tpu_custom_call.1} parent=11 // pred_check
          %p253 = pneg %p65
        $region14: #{tpu_custom_call.1} parent=11 // pred_check_branch
          %255 = sbr.rel (%p253) target = $region16
        $region15: #{tpu_custom_call.1} parent=11 // pred_region
          _
        $region16: #{tpu_custom_call.1} parent=11 // pred_fallthru
          _
        // Predicated region
        $region17: #{tpu_custom_call.1} parent=11 // pred_check
          %p256 = pneg %p86
        $region18: #{tpu_custom_call.1} parent=11 // pred_check_branch
          %258 = sbr.rel (%p256) target = $region20
        $region19: #{tpu_custom_call.1} parent=11 // pred_region
          _
        $region20: #{tpu_custom_call.1} parent=11 // pred_fallthru
          _
        // Predicated region
        $region21: #{tpu_custom_call.1} parent=11 // pred_check
          %p259 = pneg %p107
        $region22: #{tpu_custom_call.1} parent=11 // pred_check_branch
          %261 = sbr.rel (%p259) target = $region24
        $region23: #{tpu_custom_call.1} parent=11 // pred_region
          _
        $region24: #{tpu_custom_call.1} parent=11 // pred_fallthru
          _
        // Predicated region
        $region25: #{tpu_custom_call.1} parent=11 // pred_check
          %p262 = pneg %p128
        $region26: #{tpu_custom_call.1} parent=11 // pred_check_branch
          %264 = sbr.rel (%p262) target = $region28
        $region27: #{tpu_custom_call.1} parent=11 // pred_region
          _
        $region28: #{tpu_custom_call.1} parent=11 // pred_fallthru
          _
        // Predicated region
        $region29: #{tpu_custom_call.1} parent=11 // pred_check
          %p265 = pneg %p149
        $region30: #{tpu_custom_call.1} parent=11 // pred_check_branch
          %267 = sbr.rel (%p265) target = $region32
        $region31: #{tpu_custom_call.1} parent=11 // pred_region
          _
        $region32: #{tpu_custom_call.1} parent=11 // pred_fallthru
          _
        // Predicated region
        $region33: #{tpu_custom_call.1} parent=11 // pred_check
          %p268 = pneg %p170
        $region34: #{tpu_custom_call.1} parent=11 // pred_check_branch
          %270 = sbr.rel (%p268) target = $region36
        $region35: #{tpu_custom_call.1} parent=11 // pred_region
          _
        $region36: #{tpu_custom_call.1} parent=11 // pred_fallthru
          _
        // Predicated region
        $region37: #{tpu_custom_call.1} parent=11 // pred_check
          %p271 = pneg %p191
        $region38: #{tpu_custom_call.1} parent=11 // pred_check_branch
          %273 = sbr.rel (%p271) target = $region40
        $region39: #{tpu_custom_call.1} parent=11 // pred_region
          _
        $region40: #{tpu_custom_call.1} parent=11 // pred_fallthru
          _
        // Predicated region
        $region41: #{tpu_custom_call.1} parent=11 // pred_check
          %p274 = pneg %p212
        $region42: #{tpu_custom_call.1} parent=11 // pred_check_branch
          %276 = sbr.rel (%p274) target = $region44
        $region43: #{tpu_custom_call.1} parent=11 // pred_region
          _
        $region44: #{tpu_custom_call.1} parent=11 // pred_fallthru
          _
      $region12: #{tpu_custom_call.1} parent=5 // pred_fallthru
        _
      %p277 = scmp.lt.s32.totalorder %s18, 2
      // Predicated region
      $region45: #{tpu_custom_call.1} parent=5 // pred_check
        %p278 = pneg %p277
      $region46: #{tpu_custom_call.1} parent=5 // pred_check_branch
        %280 = sbr.rel (%p278) target = $region48
      $region47: #{tpu_custom_call.1} parent=5 // pred_region
        // Predicated region
        $region49: #{tpu_custom_call.1} parent=47 // pred_check
          %p281 = pneg %p38
        $region50: #{tpu_custom_call.1} parent=47 // pred_check_branch
          %283 = sbr.rel (%p281) target = $region52
        $region51: #{tpu_custom_call.1} parent=47 // pred_region
          %p284 = scmp.lt.s32.totalorder %s18, 1
          %s285 = scalar_select %p284, %s18, 1
          %s286 = smul.addr %s285, 8
          %s287 = scalar_lea.vmem %s0, %s286
        $region52: #{tpu_custom_call.1} parent=47 // pred_fallthru
          _
      $region48: #{tpu_custom_call.1} parent=5 // pred_fallthru
        _
      %p288 = scmp.le.s32.totalorder 1, %s18
      %p289 = scmp.lt.s32.totalorder %s18, 3
      %p290 = pnand %p288, %p289
      %p291 = pneg %p290
      // Predicated region
      $region53: #{tpu_custom_call.1} parent=5 // pred_check
        _
      $region54: #{tpu_custom_call.1} parent=5 // pred_check_branch
        %293 = sbr.rel (%p290) target = $region56
      $region55: #{tpu_custom_call.1} parent=5 // pred_region
        %s294 = ssub.s32 %s18, 1
        %p295 = scmp.lt.s32.totalorder %s23, 1
        %s296 = scalar_select %p295, %s23, 1
        %s297 = smul.addr %s296, 8
        %s298 = scalar_lea.vmem %s0, %s297
        %p299 = pneg %p44
        %p300 = pneg %p41
        %p301 = pneg %p65
        %p302 = pneg %p62
        %p303 = pneg %p86
        %p304 = pneg %p83
        %p305 = pneg %p107
        %p306 = pneg %p104
        %p307 = pneg %p128
        %p308 = pneg %p125
        %p309 = pneg %p149
        %p310 = pneg %p146
        %p311 = pneg %p170
        %p312 = pneg %p167
        %p313 = pneg %p191
        %p314 = pneg %p188
        %p315 = pneg %p212
        %p316 = pneg %p209
        %p317 = pneg %p238
        %p318 = pneg %p235
        %s319 = sand.u32 %s225, 1
        %s320 = scalar_lea.sflag [#allocation3], %s319
        %s321 = sand.u32 %s225, 1
        %s322 = smul.addr %s321, 8
        %s323 = scalar_lea.vmem [#allocation2], %s322
        %p324 = scmp.lt.s32.totalorder %s23, 1
        %s325 = scalar_select %p324, %s23, 1
        %s326 = smul.addr %s325, 8
        %s327 = scalar_lea.vmem %s0, %s326
        %v329 = vld [vmem:[%s327] sm:$0xff]
        %v330 = vpack.c.bf16 %v329, %v329
        %v331 = vld [vmem:[%s1] sm:$0xff]
        %v332 = vld [vmem:[%s1 + $0x8] sm:$0xff]
        %v333 = vld [vmem:[%s1 + $0x10] sm:$0xff]
        %v334 = vld [vmem:[%s1 + $0x18] sm:$0xff]
        %v335 = vpack.c.bf16 %v332, %v331
        %v336 = vpack.c.bf16 %v334, %v333
        %v337 = vld [vmem:[%s3] sm:$0xff]
        %v338 = vld [vmem:[%s3 + $0x8] sm:$0xff]
        %v339 = vld [vmem:[%s3 + $0x10] sm:$0xff]
        %v340 = vld [vmem:[%s3 + $0x18] sm:$0xff]
        %v341 = vpack.c.bf16 %v338, %v337
        %v342 = vpack.c.bf16 %v340, %v339
        %v343 = vld [vmem:[%s5] sm:$0xff]
        %v344 = vld [vmem:[%s5 + $0x8] sm:$0xff]
        %v345 = vld [vmem:[%s5 + $0x10] sm:$0xff]
        %v346 = vld [vmem:[%s5 + $0x18] sm:$0xff]
        %v347 = vpack.c.bf16 %v344, %v343
        %v348 = vpack.c.bf16 %v346, %v345
        %v349 = vld [vmem:[%s7] sm:$0xff]
        %v350 = vld [vmem:[%s7 + $0x8] sm:$0xff]
        %v351 = vld [vmem:[%s7 + $0x10] sm:$0xff]
        %v352 = vld [vmem:[%s7 + $0x18] sm:$0xff]
        %v353 = vpack.c.bf16 %v350, %v349
        %v354 = vpack.c.bf16 %v352, %v351
        %v355 = vld [vmem:[%s2] sm:$0x1]
        %v357 = vlaneseq
        %v358 = vshrl.u32 %v357, 7
        %v359 = vsub.s32 0, %v358
        %v360 = vrot.slane %v355, %v359
        %vm362 = vcmask 261120
        %v364 = vsel %vm362, %v330, 0
        %366 = vmatprep.subr.bf16.mxu0 0
        %367 = vmatpush1.bf16.msra.mxu0 %v335
        %368 = vmatprep.subr.bf16.mxu0 0
        %369 = vmatpush1.bf16.msra.mxu0 %v336
        %370 = vmatprep.subr.bf16.mxu0 0
        %371 = vmatpush1.bf16.msra.mxu0 0
        %372 = vmatprep.subr.bf16.mxu0 0
        %373 = vmatpush1.bf16.msra.mxu0 0
        %374 = vmatprep.subr.bf16.mxu0 0
        %375 = vmatpush1.bf16.msra.mxu0 0
        %376 = vmatprep.subr.bf16.mxu0 0
        %377 = vmatpush1.bf16.msra.mxu0 0
        %378 = vmatprep.subr.bf16.mxu0 0
        %379 = vmatpush1.bf16.msra.mxu0 0
        %380 = vmatprep.subr.bf16.mxu0 0
        %381 = vmatpush1.bf16.msra.mxu0 0
        %382 = vmatprep.subr.bf16.mxu0 0
        %383 = vmatpush1.bf16.msra.mxu0 0
        %384 = vmatprep.subr.bf16.mxu0 0
        %385 = vmatpush1.bf16.msra.mxu0 0
        %386 = vmatprep.subr.bf16.mxu0 0
        %387 = vmatpush1.bf16.msra.mxu0 0
        %388 = vmatprep.subr.bf16.mxu0 0
        %389 = vmatpush1.bf16.msra.mxu0 0
        %390 = vmatprep.subr.bf16.mxu0 0
        %391 = vmatpush1.bf16.msra.mxu0 0
        %392 = vmatprep.subr.bf16.mxu0 0
        %393 = vmatpush1.bf16.msra.mxu0 0
        %394 = vmatprep.subr.bf16.mxu0 0
        %395 = vmatpush1.bf16.msra.mxu0 0
        %396 = vmatprep.subr.bf16.mxu0 0
        %397 = vmatpush1.bf16.msra.mxu0 0
        %398 = vmatprep.mubr.bf16.mxu0 0
        %399 = vmatmul.mubr.bf16.gmra.mrb[0].mxu0 %v364
        %v400 = vpop.f32.mrb[0].mxu0
        %v401 = vadd.f32 %v360, %v400
        %v402 = vpop.f32.mrb[0].mxu0
        %v403 = vpop.f32.mrb[0].mxu0
        %v404 = vpop.f32.mrb[0].mxu0
        %405 = vdwg.mxu0
        %v406 = vld [vmem:[%s4] sm:$0x1]
        %v408 = vlaneseq
        %v409 = vshrl.u32 %v408, 7
        %v410 = vsub.s32 0, %v409
        %v411 = vrot.slane %v406, %v410
        %413 = vmatprep.subr.bf16.mxu0 0
        %414 = vmatpush1.bf16.msra.mxu0 %v341
        %415 = vmatprep.subr.bf16.mxu0 0
        %416 = vmatpush1.bf16.msra.mxu0 %v342
        %417 = vmatprep.subr.bf16.mxu0 0
        %418 = vmatpush1.bf16.msra.mxu0 0
        %419 = vmatprep.subr.bf16.mxu0 0
        %420 = vmatpush1.bf16.msra.mxu0 0
        %421 = vmatprep.subr.bf16.mxu0 0
        %422 = vmatpush1.bf16.msra.mxu0 0
        %423 = vmatprep.subr.bf16.mxu0 0
        %424 = vmatpush1.bf16.msra.mxu0 0
        %425 = vmatprep.subr.bf16.mxu0 0
        %426 = vmatpush1.bf16.msra.mxu0 0
        %427 = vmatprep.subr.bf16.mxu0 0
        %428 = vmatpush1.bf16.msra.mxu0 0
        %429 = vmatprep.subr.bf16.mxu0 0
        %430 = vmatpush1.bf16.msra.mxu0 0
        %431 = vmatprep.subr.bf16.mxu0 0
        %432 = vmatpush1.bf16.msra.mxu0 0
        %433 = vmatprep.subr.bf16.mxu0 0
        %434 = vmatpush1.bf16.msra.mxu0 0
        %435 = vmatprep.subr.bf16.mxu0 0
        %436 = vmatpush1.bf16.msra.mxu0 0
        %437 = vmatprep.subr.bf16.mxu0 0
        %438 = vmatpush1.bf16.msra.mxu0 0
        %439 = vmatprep.subr.bf16.mxu0 0
        %440 = vmatpush1.bf16.msra.mxu0 0
        %441 = vmatprep.subr.bf16.mxu0 0
        %442 = vmatpush1.bf16.msra.mxu0 0
        %443 = vmatprep.subr.bf16.mxu0 0
        %444 = vmatpush1.bf16.msra.mxu0 0
        %445 = vmatprep.mubr.bf16.mxu0 0
        %446 = vmatmul.mubr.bf16.gmra.mrb[0].mxu0 %v364
        %v447 = vpop.f32.mrb[0].mxu0
        %v448 = vadd.f32 %v411, %v447
        %v449 = vpop.f32.mrb[0].mxu0
        %v450 = vpop.f32.mrb[0].mxu0
        %v451 = vpop.f32.mrb[0].mxu0
        %452 = vdwg.mxu0
        %v453 = vld [vmem:[%s6] sm:$0x1]
        %v455 = vlaneseq
        %v456 = vshrl.u32 %v455, 7
        %v457 = vsub.s32 0, %v456
        %v458 = vrot.slane %v453, %v457
        %460 = vmatprep.subr.bf16.mxu0 0
        %461 = vmatpush1.bf16.msra.mxu0 %v347
        %462 = vmatprep.subr.bf16.mxu0 0
        %463 = vmatpush1.bf16.msra.mxu0 %v348
        %464 = vmatprep.subr.bf16.mxu0 0
        %465 = vmatpush1.bf16.msra.mxu0 0
        %466 = vmatprep.subr.bf16.mxu0 0
        %467 = vmatpush1.bf16.msra.mxu0 0
        %468 = vmatprep.subr.bf16.mxu0 0
        %469 = vmatpush1.bf16.msra.mxu0 0
        %470 = vmatprep.subr.bf16.mxu0 0
        %471 = vmatpush1.bf16.msra.mxu0 0
        %472 = vmatprep.subr.bf16.mxu0 0
        %473 = vmatpush1.bf16.msra.mxu0 0
        %474 = vmatprep.subr.bf16.mxu0 0
        %475 = vmatpush1.bf16.msra.mxu0 0
        %476 = vmatprep.subr.bf16.mxu0 0
        %477 = vmatpush1.bf16.msra.mxu0 0
        %478 = vmatprep.subr.bf16.mxu0 0
        %479 = vmatpush1.bf16.msra.mxu0 0
        %480 = vmatprep.subr.bf16.mxu0 0
        %481 = vmatpush1.bf16.msra.mxu0 0
        %482 = vmatprep.subr.bf16.mxu0 0
        %483 = vmatpush1.bf16.msra.mxu0 0
        %484 = vmatprep.subr.bf16.mxu0 0
        %485 = vmatpush1.bf16.msra.mxu0 0
        %486 = vmatprep.subr.bf16.mxu0 0
        %487 = vmatpush1.bf16.msra.mxu0 0
        %488 = vmatprep.subr.bf16.mxu0 0
        %489 = vmatpush1.bf16.msra.mxu0 0
        %490 = vmatprep.subr.bf16.mxu0 0
        %491 = vmatpush1.bf16.msra.mxu0 0
        %492 = vmatprep.mubr.bf16.mxu0 0
        %493 = vmatmul.mubr.bf16.gmra.mrb[0].mxu0 %v364
        %v494 = vpop.f32.mrb[0].mxu0
        %v495 = vadd.f32 %v458, %v494
        %v496 = vpop.f32.mrb[0].mxu0
        %v497 = vpop.f32.mrb[0].mxu0
        %v498 = vpop.f32.mrb[0].mxu0
        %499 = vdwg.mxu0
        %v500 = vmul.f32 %v401, 0.35355338
        %v501 = vpack.c.bf16 %v500, %v500
        %v502 = vpack.c.bf16 %v448, %v448
        %v503 = vpack.c.bf16 %v495, %v495
        %v505 = vrot.slane %v501, 4
        %506 = vrot.lane.b32.xlu0 %v505, 120
        %v507 = vpop.permute.xlu0 %506
        %vm508 = vcmask 1043456
        %v511 = vsel %vm508, %v501, %v507
        %vm512 = vcmask 64512
        %v513 = vsel %vm512, %v511, 0
        %v516 = vsel %vm512, %v502, 0
        %518 = vmatprep.subr.bf16.mxu0 0
        %519 = vmatpush1.bf16.xpose.msra.mxu0 %v516
        %520 = vmatprep.subr.bf16.mxu0 0
        %521 = vmatpush1.bf16.xpose.msra.mxu0 0
        %522 = vmatprep.subr.bf16.mxu0 0
        %523 = vmatpush1.bf16.xpose.msra.mxu0 0
        %524 = vmatprep.subr.bf16.mxu0 0
        %525 = vmatpush1.bf16.xpose.msra.mxu0 0
        %526 = vmatprep.subr.bf16.mxu0 0
        %527 = vmatpush1.bf16.xpose.msra.mxu0 0
        %528 = vmatprep.subr.bf16.mxu0 0
        %529 = vmatpush1.bf16.xpose.msra.mxu0 0
        %530 = vmatprep.subr.bf16.mxu0 0
        %531 = vmatpush1.bf16.xpose.msra.mxu0 0
        %532 = vmatprep.subr.bf16.mxu0 0
        %533 = vmatpush1.bf16.xpose.msra.mxu0 0
        %534 = vmatprep.subr.bf16.mxu0 0
        %535 = vmatpush1.bf16.xpose.msra.mxu0 0
        %536 = vmatprep.subr.bf16.mxu0 0
        %537 = vmatpush1.bf16.xpose.msra.mxu0 0
        %538 = vmatprep.subr.bf16.mxu0 0
        %539 = vmatpush1.bf16.xpose.msra.mxu0 0
        %540 = vmatprep.subr.bf16.mxu0 0
        %541 = vmatpush1.bf16.xpose.msra.mxu0 0
        %542 = vmatprep.subr.bf16.mxu0 0
        %543 = vmatpush1.bf16.xpose.msra.mxu0 0
        %544 = vmatprep.subr.bf16.mxu0 0
        %545 = vmatpush1.bf16.xpose.msra.mxu0 0
        %546 = vmatprep.subr.bf16.mxu0 0
        %547 = vmatpush1.bf16.xpose.msra.mxu0 0
        %548 = vmatprep.subr.bf16.mxu0 0
        %549 = vmatpush1.bf16.xpose.msra.mxu0 0
        %550 = vmatprep.mubr.bf16.mxu0 0
        %551 = vmatmul.mubr.bf16.gmra.mrb[0].mxu0 %v513
        %v552 = vpop.f32.mrb[0].mxu0
        %v553 = vadd.f32 0.0, %v552
        %v554 = vpop.f32.mrb[0].mxu0
        %v555 = vpop.f32.mrb[0].mxu0
        %v556 = vadd.f32 0.0, %v555
        %v557 = vpop.f32.mrb[0].mxu0
        %558 = vdwg.mxu0
        %v559 = vsel %vm512, %v553, -inf
        %560 = vmax.xlane.f32.xlu0 %v559
        %v561 = vpop.xlane.xlu0 %560
        %v562 = vsel %vm512, %v556, -inf
        %563 = vmax.xlane.f32.xlu0 %v562
        %v564 = vpop.xlane.xlu0 %563
        %v565 = vsub.f32 -inf, %v561
        %v566 = vsub.f32 -inf, %v564
        %v567 = vmul.f32 %v565, 1.442695
        %v568 = vpow.pop %v567
        %v569 = vmul.f32 %v566, 1.442695
        %v570 = vpow.pop %v569
        %v571 = vsub.f32 %v553, %v561
        %v572 = vsub.f32 %v556, %v564
        %v573 = vmul.f32 %v571, 1.442695
        %v574 = vpow.pop %v573
        %v575 = vmul.f32 %v572, 1.442695
        %v576 = vpow.pop %v575
        %v577 = vmul.f32 %v568, 0.0
        %v578 = vmul.f32 %v570, 0.0
        %v579 = vsel %vm512, %v574, 0.0
        %580 = vadd.xlane.f32.xlu0 %v579
        %v581 = vpop.xlane.xlu0 %580
        %v582 = vsel %vm512, %v576, 0.0
        %583 = vadd.xlane.f32.xlu0 %v582
        %v584 = vpop.xlane.xlu0 %583
        %v585 = vadd.f32 %v577, %v581
        %v586 = vadd.f32 %v578, %v584
        %v587 = vpack.c.bf16 %v576, %v574
        %v589 = vsel %vm512, %v587, 0
        %v592 = vsel %vm508, %v503, 0
        %594 = vmatprep.subr.bf16.mxu0 0
        %595 = vmatpush1.bf16.msra.mxu0 %v592
        %596 = vmatprep.subr.bf16.mxu0 0
        %597 = vmatpush1.bf16.msra.mxu0 0
        %598 = vmatprep.subr.bf16.mxu0 0
        %599 = vmatpush1.bf16.msra.mxu0 0
        %600 = vmatprep.subr.bf16.mxu0 0
        %601 = vmatpush1.bf16.msra.mxu0 0
        %602 = vmatprep.subr.bf16.mxu0 0
        %603 = vmatpush1.bf16.msra.mxu0 0
        %604 = vmatprep.subr.bf16.mxu0 0
        %605 = vmatpush1.bf16.msra.mxu0 0
        %606 = vmatprep.subr.bf16.mxu0 0
        %607 = vmatpush1.bf16.msra.mxu0 0
        %608 = vmatprep.subr.bf16.mxu0 0
        %609 = vmatpush1.bf16.msra.mxu0 0
        %610 = vmatprep.subr.bf16.mxu0 0
        %611 = vmatpush1.bf16.msra.mxu0 0
        %612 = vmatprep.subr.bf16.mxu0 0
        %613 = vmatpush1.bf16.msra.mxu0 0
        %614 = vmatprep.subr.bf16.mxu0 0
        %615 = vmatpush1.bf16.msra.mxu0 0
        %616 = vmatprep.subr.bf16.mxu0 0
        %617 = vmatpush1.bf16.msra.mxu0 0
        %618 = vmatprep.subr.bf16.mxu0 0
        %619 = vmatpush1.bf16.msra.mxu0 0
        %620 = vmatprep.subr.bf16.mxu0 0
        %621 = vmatpush1.bf16.msra.mxu0 0
        %622 = vmatprep.subr.bf16.mxu0 0
        %623 = vmatpush1.bf16.msra.mxu0 0
        %624 = vmatprep.subr.bf16.mxu0 0
        %625 = vmatpush1.bf16.msra.mxu0 0
        %626 = vmatprep.mubr.bf16.mxu0 0
        %627 = vmatmul.mubr.bf16.gmra.mrb[0].mxu0 %v589
        %v628 = vpop.f32.mrb[0].mxu0
        %v629 = vadd.f32 0.0, %v628
        %v630 = vpop.f32.mrb[0].mxu0
        %v631 = vpop.f32.mrb[0].mxu0
        %v632 = vadd.f32 0.0, %v631
        %v633 = vpop.f32.mrb[0].mxu0
        %634 = vdwg.mxu0
        %v635 = vadd.f32 %v577, %v629
        %v636 = vadd.f32 %v578, %v632
        %v637 = vrcp.pop %v585
        %v638 = vrcp.pop %v586
        %v639 = vmul.f32 %v635, %v637
        %v640 = vmul.f32 %v636, %v638
        %v641 = vpack.c.bf16 %v639, %v639
        %v642 = vpack.c.bf16 %v640, %v640
        %v644 = vrot.slane %v353, 4
        %v646 = vsel %vm512, %v642, 0
        %v649 = vsel %vm508, %v644, 0
        %651 = vmatprep.subr.bf16.mxu0 0
        %652 = vmatpush1.bf16.msra.mxu0 %v649
        %653 = vmatprep.subr.bf16.mxu0 0
        %654 = vmatpush1.bf16.msra.mxu0 0
        %655 = vmatprep.subr.bf16.mxu0 0
        %656 = vmatpush1.bf16.msra.mxu0 0
        %657 = vmatprep.subr.bf16.mxu0 0
        %658 = vmatpush1.bf16.msra.mxu0 0
        %659 = vmatprep.subr.bf16.mxu0 0
        %660 = vmatpush1.bf16.msra.mxu0 0
        %661 = vmatprep.subr.bf16.mxu0 0
        %662 = vmatpush1.bf16.msra.mxu0 0
        %663 = vmatprep.subr.bf16.mxu0 0
        %664 = vmatpush1.bf16.msra.mxu0 0
        %665 = vmatprep.subr.bf16.mxu0 0
        %666 = vmatpush1.bf16.msra.mxu0 0
        %667 = vmatprep.subr.bf16.mxu0 0
        %668 = vmatpush1.bf16.msra.mxu0 0
        %669 = vmatprep.subr.bf16.mxu0 0
        %670 = vmatpush1.bf16.msra.mxu0 0
        %671 = vmatprep.subr.bf16.mxu0 0
        %672 = vmatpush1.bf16.msra.mxu0 0
        %673 = vmatprep.subr.bf16.mxu0 0
        %674 = vmatpush1.bf16.msra.mxu0 0
        %675 = vmatprep.subr.bf16.mxu0 0
        %676 = vmatpush1.bf16.msra.mxu0 0
        %677 = vmatprep.subr.bf16.mxu0 0
        %678 = vmatpush1.bf16.msra.mxu0 0
        %679 = vmatprep.subr.bf16.mxu0 0
        %680 = vmatpush1.bf16.msra.mxu0 0
        %681 = vmatprep.subr.bf16.mxu0 0
        %682 = vmatpush1.bf16.msra.mxu0 0
        %683 = vmatprep.mubr.bf16.mxu0 0
        %684 = vmatmul.mubr.bf16.gmra.mrb[0].mxu0 %v646
        %v685 = vpop.f32.mrb[0].mxu0
        %v686 = vadd.f32 0.0, %v685
        %v687 = vpop.f32.mrb[0].mxu0
        %v688 = vpop.f32.mrb[0].mxu0
        %v689 = vpop.f32.mrb[0].mxu0
        %690 = vdwg.mxu0
        %v692 = vsel %vm512, %v641, 0
        %v695 = vsel %vm508, %v353, 0
        %697 = vmatprep.subr.bf16.mxu0 0
        %698 = vmatpush1.bf16.msra.mxu0 %v695
        %699 = vmatprep.subr.bf16.mxu0 0
        %700 = vmatpush1.bf16.msra.mxu0 0
        %701 = vmatprep.subr.bf16.mxu0 0
        %702 = vmatpush1.bf16.msra.mxu0 0
        %703 = vmatprep.subr.bf16.mxu0 0
        %704 = vmatpush1.bf16.msra.mxu0 0
        %705 = vmatprep.subr.bf16.mxu0 0
        %706 = vmatpush1.bf16.msra.mxu0 0
        %707 = vmatprep.subr.bf16.mxu0 0
        %708 = vmatpush1.bf16.msra.mxu0 0
        %709 = vmatprep.subr.bf16.mxu0 0
        %710 = vmatpush1.bf16.msra.mxu0 0
        %711 = vmatprep.subr.bf16.mxu0 0
        %712 = vmatpush1.bf16.msra.mxu0 0
        %713 = vmatprep.subr.bf16.mxu0 0
        %714 = vmatpush1.bf16.msra.mxu0 0
        %715 = vmatprep.subr.bf16.mxu0 0
        %716 = vmatpush1.bf16.msra.mxu0 0
        %717 = vmatprep.subr.bf16.mxu0 0
        %718 = vmatpush1.bf16.msra.mxu0 0
        %719 = vmatprep.subr.bf16.mxu0 0
        %720 = vmatpush1.bf16.msra.mxu0 0
        %721 = vmatprep.subr.bf16.mxu0 0
        %722 = vmatpush1.bf16.msra.mxu0 0
        %723 = vmatprep.subr.bf16.mxu0 0
        %724 = vmatpush1.bf16.msra.mxu0 0
        %725 = vmatprep.subr.bf16.mxu0 0
        %726 = vmatpush1.bf16.msra.mxu0 0
        %727 = vmatprep.subr.bf16.mxu0 0
        %728 = vmatpush1.bf16.msra.mxu0 0
        %729 = vmatprep.mubr.bf16.mxu0 0
        %730 = vmatmul.mubr.bf16.gmra.mrb[0].mxu0 %v692
        %v731 = vpop.f32.mrb[0].mxu0
        %v732 = vadd.f32 %v686, %v731
        %v733 = vpop.f32.mrb[0].mxu0
        %v734 = vpop.f32.mrb[0].mxu0
        %v735 = vpop.f32.mrb[0].mxu0
        %736 = vdwg.mxu0
        %738 = vrot.lane.b32.xlu0 %v511, 112
        %v739 = vpop.permute.xlu0 %738
        %741 = vrot.lane.b32.xlu0 %v502, 120
        %v742 = vpop.permute.xlu0 %741
        %v744 = vsel %vm512, %v739, 0
        %v747 = vsel %vm512, %v742, 0
        %749 = vmatprep.subr.bf16.mxu0 0
        %750 = vmatpush1.bf16.xpose.msra.mxu0 %v747
        %751 = vmatprep.subr.bf16.mxu0 0
        %752 = vmatpush1.bf16.xpose.msra.mxu0 0
        %753 = vmatprep.subr.bf16.mxu0 0
        %754 = vmatpush1.bf16.xpose.msra.mxu0 0
        %755 = vmatprep.subr.bf16.mxu0 0
        %756 = vmatpush1.bf16.xpose.msra.mxu0 0
        %757 = vmatprep.subr.bf16.mxu0 0
        %758 = vmatpush1.bf16.xpose.msra.mxu0 0
        %759 = vmatprep.subr.bf16.mxu0 0
        %760 = vmatpush1.bf16.xpose.msra.mxu0 0
        %761 = vmatprep.subr.bf16.mxu0 0
        %762 = vmatpush1.bf16.xpose.msra.mxu0 0
        %763 = vmatprep.subr.bf16.mxu0 0
        %764 = vmatpush1.bf16.xpose.msra.mxu0 0
        %765 = vmatprep.subr.bf16.mxu0 0
        %766 = vmatpush1.bf16.xpose.msra.mxu0 0
        %767 = vmatprep.subr.bf16.mxu0 0
        %768 = vmatpush1.bf16.xpose.msra.mxu0 0
        %769 = vmatprep.subr.bf16.mxu0 0
        %770 = vmatpush1.bf16.xpose.msra.mxu0 0
        %771 = vmatprep.subr.bf16.mxu0 0
        %772 = vmatpush1.bf16.xpose.msra.mxu0 0
        %773 = vmatprep.subr.bf16.mxu0 0
        %774 = vmatpush1.bf16.xpose.msra.mxu0 0
        %775 = vmatprep.subr.bf16.mxu0 0
        %776 = vmatpush1.bf16.xpose.msra.mxu0 0
        %777 = vmatprep.subr.bf16.mxu0 0
        %778 = vmatpush1.bf16.xpose.msra.mxu0 0
        %779 = vmatprep.subr.bf16.mxu0 0
        %780 = vmatpush1.bf16.xpose.msra.mxu0 0
        %781 = vmatprep.mubr.bf16.mxu0 0
        %782 = vmatmul.mubr.bf16.gmra.mrb[0].mxu0 %v744
        %v783 = vpop.f32.mrb[0].mxu0
        %v784 = vadd.f32 0.0, %v783
        %v785 = vpop.f32.mrb[0].mxu0
        %v786 = vpop.f32.mrb[0].mxu0
        %v787 = vadd.f32 0.0, %v786
        %v788 = vpop.f32.mrb[0].mxu0
        %789 = vdwg.mxu0
        %v790 = vsel %vm512, %v784, -inf
        %791 = vmax.xlane.f32.xlu0 %v790
        %v792 = vpop.xlane.xlu0 %791
        %v793 = vsel %vm512, %v787, -inf
        %794 = vmax.xlane.f32.xlu0 %v793
        %v795 = vpop.xlane.xlu0 %794
        %v796 = vsub.f32 -inf, %v792
        %v797 = vsub.f32 -inf, %v795
        %v798 = vmul.f32 %v796, 1.442695
        %v799 = vpow.pop %v798
        %v800 = vmul.f32 %v797, 1.442695
        %v801 = vpow.pop %v800
        %v802 = vsub.f32 %v784, %v792
        %v803 = vsub.f32 %v787, %v795
        %v804 = vmul.f32 %v802, 1.442695
        %v805 = vpow.pop %v804
        %v806 = vmul.f32 %v803, 1.442695
        %v807 = vpow.pop %v806
        %v808 = vmul.f32 %v799, 0.0
        %v809 = vmul.f32 %v801, 0.0
        %v810 = vsel %vm512, %v805, 0.0
        %811 = vadd.xlane.f32.xlu0 %v810
        %v812 = vpop.xlane.xlu0 %811
        %v813 = vsel %vm512, %v807, 0.0
        %814 = vadd.xlane.f32.xlu0 %v813
        %v815 = vpop.xlane.xlu0 %814
        %v816 = vadd.f32 %v808, %v812
        %v817 = vadd.f32 %v809, %v815
        %v818 = vpack.c.bf16 %v807, %v805
        %820 = vrot.lane.b32.xlu0 %v503, 120
        %v821 = vpop.permute.xlu0 %820
        %v823 = vsel %vm512, %v818, 0
        %v826 = vsel %vm508, %v821, 0
        %828 = vmatprep.subr.bf16.mxu0 0
        %829 = vmatpush1.bf16.msra.mxu0 %v826
        %830 = vmatprep.subr.bf16.mxu0 0
        %831 = vmatpush1.bf16.msra.mxu0 0
        %832 = vmatprep.subr.bf16.mxu0 0
        %833 = vmatpush1.bf16.msra.mxu0 0
        %834 = vmatprep.subr.bf16.mxu0 0
        %835 = vmatpush1.bf16.msra.mxu0 0
        %836 = vmatprep.subr.bf16.mxu0 0
        %837 = vmatpush1.bf16.msra.mxu0 0
        %838 = vmatprep.subr.bf16.mxu0 0
        %839 = vmatpush1.bf16.msra.mxu0 0
        %840 = vmatprep.subr.bf16.mxu0 0
        %841 = vmatpush1.bf16.msra.mxu0 0
        %842 = vmatprep.subr.bf16.mxu0 0
        %843 = vmatpush1.bf16.msra.mxu0 0
        %844 = vmatprep.subr.bf16.mxu0 0
        %845 = vmatpush1.bf16.msra.mxu0 0
        %846 = vmatprep.subr.bf16.mxu0 0
        %847 = vmatpush1.bf16.msra.mxu0 0
        %848 = vmatprep.subr.bf16.mxu0 0
        %849 = vmatpush1.bf16.msra.mxu0 0
        %850 = vmatprep.subr.bf16.mxu0 0
        %851 = vmatpush1.bf16.msra.mxu0 0
        %852 = vmatprep.subr.bf16.mxu0 0
        %853 = vmatpush1.bf16.msra.mxu0 0
        %854 = vmatprep.subr.bf16.mxu0 0
        %855 = vmatpush1.bf16.msra.mxu0 0
        %856 = vmatprep.subr.bf16.mxu0 0
        %857 = vmatpush1.bf16.msra.mxu0 0
        %858 = vmatprep.subr.bf16.mxu0 0
        %859 = vmatpush1.bf16.msra.mxu0 0
        %860 = vmatprep.mubr.bf16.mxu0 0
        %861 = vmatmul.mubr.bf16.gmra.mrb[0].mxu0 %v823
        %v862 = vpop.f32.mrb[0].mxu0
        %v863 = vadd.f32 0.0, %v862
        %v864 = vpop.f32.mrb[0].mxu0
        %v865 = vpop.f32.mrb[0].mxu0
        %v866 = vadd.f32 0.0, %v865
        %v867 = vpop.f32.mrb[0].mxu0
        %868 = vdwg.mxu0
        %v869 = vadd.f32 %v808, %v863
        %v870 = vadd.f32 %v809, %v866
        %v871 = vrcp.pop %v816
        %v872 = vrcp.pop %v817
        %v873 = vmul.f32 %v869, %v871
        %v874 = vmul.f32 %v870, %v872
        %v875 = vpack.c.bf16 %v873, %v873
        %v877 = vsel %vm512, %v875, 0
        %v880 = vsel %vm508, %v354, 0
        %882 = vmatprep.subr.bf16.mxu0 0
        %883 = vmatpush1.bf16.msra.mxu0 %v880
        %884 = vmatprep.subr.bf16.mxu0 0
        %885 = vmatpush1.bf16.msra.mxu0 0
        %886 = vmatprep.subr.bf16.mxu0 0
        %887 = vmatpush1.bf16.msra.mxu0 0
        %888 = vmatprep.subr.bf16.mxu0 0
        %889 = vmatpush1.bf16.msra.mxu0 0
        %890 = vmatprep.subr.bf16.mxu0 0
        %891 = vmatpush1.bf16.msra.mxu0 0
        %892 = vmatprep.subr.bf16.mxu0 0
        %893 = vmatpush1.bf16.msra.mxu0 0
        %894 = vmatprep.subr.bf16.mxu0 0
        %895 = vmatpush1.bf16.msra.mxu0 0
        %896 = vmatprep.subr.bf16.mxu0 0
        %897 = vmatpush1.bf16.msra.mxu0 0
        %898 = vmatprep.subr.bf16.mxu0 0
        %899 = vmatpush1.bf16.msra.mxu0 0
        %900 = vmatprep.subr.bf16.mxu0 0
        %901 = vmatpush1.bf16.msra.mxu0 0
        %902 = vmatprep.subr.bf16.mxu0 0
        %903 = vmatpush1.bf16.msra.mxu0 0
        %904 = vmatprep.subr.bf16.mxu0 0
        %905 = vmatpush1.bf16.msra.mxu0 0
        %906 = vmatprep.subr.bf16.mxu0 0
        %907 = vmatpush1.bf16.msra.mxu0 0
        %908 = vmatprep.subr.bf16.mxu0 0
        %909 = vmatpush1.bf16.msra.mxu0 0
        %910 = vmatprep.subr.bf16.mxu0 0
        %911 = vmatpush1.bf16.msra.mxu0 0
        %912 = vmatprep.subr.bf16.mxu0 0
        %913 = vmatpush1.bf16.msra.mxu0 0
        %914 = vmatprep.mubr.bf16.mxu0 0
        %915 = vmatmul.mubr.bf16.gmra.mrb[0].mxu0 %v877
        %v916 = vpop.f32.mrb[0].mxu0
        %v917 = vadd.f32 0.0, %v916
        %v918 = vpop.f32.mrb[0].mxu0
        %v919 = vpop.f32.mrb[0].mxu0
        %v920 = vpop.f32.mrb[0].mxu0
        %921 = vdwg.mxu0
        %v922 = vadd.f32 %v732, %v917
        %v923 = vpack.c.bf16 %v874, %v874
        %v925 = vrot.slane %v354, 4
        %v927 = vsel %vm512, %v923, 0
        %v930 = vsel %vm508, %v925, 0
        %932 = vmatprep.subr.bf16.mxu0 0
        %933 = vmatpush1.bf16.msra.mxu0 %v930
        %934 = vmatprep.subr.bf16.mxu0 0
        %935 = vmatpush1.bf16.msra.mxu0 0
        %936 = vmatprep.subr.bf16.mxu0 0
        %937 = vmatpush1.bf16.msra.mxu0 0
        %938 = vmatprep.subr.bf16.mxu0 0
        %939 = vmatpush1.bf16.msra.mxu0 0
        %940 = vmatprep.subr.bf16.mxu0 0
        %941 = vmatpush1.bf16.msra.mxu0 0
        %942 = vmatprep.subr.bf16.mxu0 0
        %943 = vmatpush1.bf16.msra.mxu0 0
        %944 = vmatprep.subr.bf16.mxu0 0
        %945 = vmatpush1.bf16.msra.mxu0 0
        %946 = vmatprep.subr.bf16.mxu0 0
        %947 = vmatpush1.bf16.msra.mxu0 0
        %948 = vmatprep.subr.bf16.mxu0 0
        %949 = vmatpush1.bf16.msra.mxu0 0
        %950 = vmatprep.subr.bf16.mxu0 0
        %951 = vmatpush1.bf16.msra.mxu0 0
        %952 = vmatprep.subr.bf16.mxu0 0
        %953 = vmatpush1.bf16.msra.mxu0 0
        %954 = vmatprep.subr.bf16.mxu0 0
        %955 = vmatpush1.bf16.msra.mxu0 0
        %956 = vmatprep.subr.bf16.mxu0 0
        %957 = vmatpush1.bf16.msra.mxu0 0
        %958 = vmatprep.subr.bf16.mxu0 0
        %959 = vmatpush1.bf16.msra.mxu0 0
        %960 = vmatprep.subr.bf16.mxu0 0
        %961 = vmatpush1.bf16.msra.mxu0 0
        %962 = vmatprep.subr.bf16.mxu0 0
        %963 = vmatpush1.bf16.msra.mxu0 0
        %964 = vmatprep.mubr.bf16.mxu0 0
        %965 = vmatmul.mubr.bf16.gmra.mrb[0].mxu0 %v927
        %v966 = vpop.f32.mrb[0].mxu0
        %v967 = vadd.f32 0.0, %v966
        %v968 = vpop.f32.mrb[0].mxu0
        %v969 = vpop.f32.mrb[0].mxu0
        %v970 = vpop.f32.mrb[0].mxu0
        %971 = vdwg.mxu0
        %v972 = vadd.f32 %v922, %v967
        %v973 = vld [vmem:[%s8] sm:$0x1]
        %v975 = vlaneseq
        %v976 = vshrl.u32 %v975, 7
        %v977 = vsub.s32 0, %v976
        %v978 = vrot.slane %v973, %v977
        %v980 = vadd.f32 %v972, %v978
        %981 = vst.msk [vmem:[%s323] sm:$0xff] %vm362, %v980
        %s982 = sand.u32 %s225, 1
        %s983 = scalar_lea.sflag [#allocation3], %s982
        %s984 = sand.u32 %s225, 1
        %s985 = smul.addr %s984, 8
        %s986 = scalar_lea.vmem [#allocation2], %s985
        // Predicated region
        $region57: #{tpu_custom_call.1} parent=55 // pred_check
          %p987 = pneg %p235
        $region58: #{tpu_custom_call.1} parent=55 // pred_check_branch
          %989 = sbr.rel (%p987) target = $region60
        $region59: #{tpu_custom_call.1} parent=55 // pred_region
          %s991 = ssub.s32 128, 128
          %992 = vsyncadd %s983, %s991
          %s993 = smul.addr %s23, 128
          %s994 = scalar_lea.hbm %s9, %s993
          %s996 = sshll.u32 %s986, 4
          %s997 = int_to_ptr.vmem [resolvable:$true] %s996
          %999 = dma.vmem_to_hbm [thread:$0]  %s997, 128, %s994, %s983
        $region60: #{tpu_custom_call.1} parent=55 // pred_fallthru
          _
      $region56: #{tpu_custom_call.1} parent=5 // pred_fallthru
        _
      %p1000 = scmp.le.s32.totalorder 2, %s18
      // Predicated region
      $region61: #{tpu_custom_call.1} parent=5 // pred_check
        %p1001 = pneg %p1000
      $region62: #{tpu_custom_call.1} parent=5 // pred_check_branch
        %1003 = sbr.rel (%p1001) target = $region64
      $region63: #{tpu_custom_call.1} parent=5 // pred_region
        %s1004 = ssub.s32 %s18, 2
        // Predicated region
        $region65: #{tpu_custom_call.1} parent=63 // pred_check
          %p1005 = pneg %p241
        $region66: #{tpu_custom_call.1} parent=63 // pred_check_branch
          %1007 = sbr.rel (%p1005) target = $region68
        $region67: #{tpu_custom_call.1} parent=63 // pred_region
          %s1008 = sand.u32 %s226, 1
          %s1009 = scalar_lea.sflag [#allocation3], %s1008
          %s1010 = sand.u32 %s226, 1
          %s1011 = smul.addr %s1010, 8
          %s1012 = scalar_lea.vmem [#allocation2], %s1011
          %1013 = dma.done %s1009, 128
        $region68: #{tpu_custom_call.1} parent=63 // pred_fallthru
          _
      $region64: #{tpu_custom_call.1} parent=5 // pred_fallthru
        _
    $region6: #{tpu_custom_call.1} parent=1 // loop_footer
      %s22 = sadd.s32 1, %s18
    $region7: #{tpu_custom_call.1} parent=1 // loop_footer_branch
      %17 = sbr.rel target = $region3
    $region8: #{tpu_custom_call.1} parent=1 // loop_exit
      _
    %1014 = vsyncpa [#allocation3], 1
    %s1015 = scalar_lea.sflag [#allocation3], 1
    %1016 = vsyncpa %s1015, 1

</llo_original>
